<compile_context>
chip_gen: v5e
topology: v5e:2x2
jax: 0.10.0
libtpu: 0.0.40
codegen_flags: <defaults>
</compile_context>

<pallas_src>
import functools

import jax
import jax.numpy as jnp
from jax.experimental import pallas as pl
from jax.experimental.pallas import tpu as pltpu


def _round_up(x, m):
    return (x + m - 1) // m * m


# ---------------------------------------------------------------------------
# Kernels
# ---------------------------------------------------------------------------

def _mlp_resident_kernel(x_ref, wgu_ref, wd_ref, o_ref):
    """Whole-weight-resident SwiGLU MLP: one token tile per grid step."""
    I = wgu_ref.shape[1] // 2
    x = x_ref[...]  # (tm, H), native dtype -> fast bf16 MXU path when bf16
    gate = jnp.dot(x, wgu_ref[:, :I], preferred_element_type=jnp.float32)
    up = jnp.dot(x, wgu_ref[:, I:], preferred_element_type=jnp.float32)
    # SiluAndMul in f32 (EUP sigmoid), cast back so the down matmul runs in the
    # weights' MXU mode; no accumulator needed (single reduction step).
    h = (gate * jax.lax.logistic(gate) * up).astype(wd_ref.dtype)
    o_ref[...] = jnp.dot(h, wd_ref[...],
                         preferred_element_type=jnp.float32).astype(o_ref.dtype)


def _mlp_stream_kernel(x_ref, wg_ref, wu_ref, wd_ref, o_ref, acc_ref, *,
                       ti, wd_resident):
    """Streaming SwiGLU MLP: reduce over intermediate tiles into a f32 acc."""
    j = pl.program_id(1)

    @pl.when(j == 0)
    def _():
        acc_ref[...] = jnp.zeros_like(acc_ref)

    x = x_ref[...]
    gate = jnp.dot(x, wg_ref[...], preferred_element_type=jnp.float32)  # (tm, ti)
    up = jnp.dot(x, wu_ref[...], preferred_element_type=jnp.float32)    # (tm, ti)
    h = (gate * jax.lax.logistic(gate) * up).astype(wd_ref.dtype)

    if wd_resident:
        row = pl.multiple_of(j * ti, ti)
        wd = wd_ref[pl.ds(row, ti), :]        # rows of the VMEM-resident W_down
    else:
        wd = wd_ref[...]                      # streamed (ti, H) slab

    # Keep the fused += dot form so the MXU result path (MRB on v7x) does the
    # accumulation instead of extra VPU adds.
    acc_ref[...] += jnp.dot(h, wd, preferred_element_type=jnp.float32)

    @pl.when(j == pl.num_programs(1) - 1)
    def _():
        o_ref[...] = acc_ref[...].astype(o_ref.dtype)


# ---------------------------------------------------------------------------
# VMEM planning
# ---------------------------------------------------------------------------

def _vmem_capacity_bytes():
    try:
        return int(pltpu.get_tpu_info().vmem_capacity_bytes)
    except Exception:
        return 64 << 20  # conservative (v7x-sized) fallback


def _resident_footprint(tm, H, I, x_isz, o_isz, w_isz):
    io = 2 * tm * H * (x_isz + o_isz)                 # double-buffered x / out
    weights = H * 2 * I * w_isz + I * H * w_isz       # gate_up + down, 1 copy
    temps = tm * I * 12 + tm * H * 4                  # gate/up f32, h, down out
    return io + weights + temps


def _stream_footprint(tm, ti, H, I, x_isz, o_isz, w_isz, wd_resident):
    io = 2 * tm * H * (x_isz + o_isz)                 # double-buffered x / out
    acc = tm * H * 4                                  # f32 accumulator
    gate_up = 2 * 2 * H * ti * w_isz                  # gate & up slabs, dbl-buf
    wd = I * H * w_isz if wd_resident else 2 * ti * H * w_isz
    temps = tm * ti * 12 + tm * H * 4
    return io + acc + gate_up + wd + temps


def _candidate_tiles(I):
    """Divisors of I that are multiples of 128, preferring 256-multiples, desc."""
    cands = {t for t in range(256, I, 256) if I % t == 0}
    cands |= {t for t in range(128, I, 128) if I % t == 0}
    return sorted(cands, reverse=True)


def _pick_stream_tiles(tm, H, I, x_isz, o_isz, w_isz, budget):
    cands = _candidate_tiles(I)
    # Prefer a fully resident W_down (saves re-streaming 1/3 of weight bytes).
    for wd_res in (True, False):
        for t in cands:
            if _stream_footprint(tm, t, H, I, x_isz, o_isz, w_isz, wd_res) <= budget:
                return t, wd_res
    # Nothing fits the budget: best effort with the smallest legal tile.
    return (cands[-1] if cands else I), False


# ---------------------------------------------------------------------------
# Wrapper
# ---------------------------------------------------------------------------

def pixtral_mlp(x, w_gate_up, w_down, *, tm=None, ti=None, wd_resident=None):
    """x: (S, H); w_gate_up: (H, 2I); w_down: (I, H). Returns (S, H) in x.dtype."""
    S, H = x.shape
    two_I = w_gate_up.shape[1]
    I = two_I // 2
    assert w_gate_up.shape == (H, two_I) and two_I == 2 * I
    assert w_down.shape == (I, H)

    x_isz = jnp.dtype(x.dtype).itemsize
    o_isz = x_isz
    w_isz = jnp.dtype(w_gate_up.dtype).itemsize

    cap = _vmem_capacity_bytes()
    vmem_limit = (cap * 7) // 8            # ~56 MiB on v7x, ~112 MiB on v5e/v6e
    budget = int(vmem_limit * 0.9)         # headroom for unmodeled compiler temps

    s16 = max(16, _round_up(S, 16))

    def clamp_tm(t):
        return max(16, min(_round_up(t, 16), s16))

    # --- mode selection -----------------------------------------------------
    if ti is not None:
        resident = ti >= I
    elif I % 128 != 0:
        resident = True                    # streaming blocks need 128-mult lanes
    else:
        tm_try = clamp_tm(tm if tm is not None else 256)
        resident = _resident_footprint(tm_try, H, I, x_isz, o_isz, w_isz) <= budget

    if resident:
        tm = clamp_tm(tm if tm is not None else 256)
        ti = I
        n_red = 1
        wd_resident = True
    else:
        # Streaming: bigger token tile amortizes per-token-tile weight re-reads.
        tm = clamp_tm(tm if tm is not None else 512)
        if ti is None:
            ti, wd_res_auto = _pick_stream_tiles(tm, H, I, x_isz, o_isz, w_isz,
                                                 budget)
            if wd_resident is None:
                wd_resident = wd_res_auto
        else:
            assert I % ti == 0, "intermediate tile must divide intermediate_size"
            assert ti == I or ti % 128 == 0, "intermediate tile must be 128-mult"
            if wd_resident is None:
                wd_resident = _stream_footprint(tm, ti, H, I, x_isz, o_isz,
                                                w_isz, True) <= budget
        n_red = I // ti

    # --- token-axis padding ---------------------------------------------------
    S_pad = _round_up(S, tm)
    if S_pad != S:
        x = jnp.pad(x, ((0, S_pad - S), (0, 0)))
    n_tok = S_pad // tm

    # --- cost estimate (weights re-read per token tile when streaming) --------
    wgu_bytes = w_gate_up.size * w_isz
    wd_bytes = w_down.size * w_isz
    if resident:
        weight_bytes = wgu_bytes + wd_bytes
    else:
        weight_bytes = wgu_bytes * n_tok + wd_bytes * (1 if wd_resident else n_tok)
    bytes_accessed = S_pad * H * x_isz + weight_bytes + S_pad * H * o_isz

    if resident:
        kernel = _mlp_resident_kernel
        grid_spec = pltpu.PrefetchScalarGridSpec(
            num_scalar_prefetch=0,
            grid=(n_tok,),
            in_specs=[
                pl.BlockSpec((tm, H), lambda i: (i, 0)),             # x token tile
                pl.BlockSpec(memory_space=pltpu.MemorySpace.VMEM),   # gate_up (whole)
                pl.BlockSpec(memory_space=pltpu.MemorySpace.VMEM),   # down (whole)
            ],
            out_specs=pl.BlockSpec((tm, H), lambda i: (i, 0)),
        )
        dim_sem = ("parallel",)
        args = (x, w_gate_up, w_down)
    else:
        kernel = functools.partial(_mlp_stream_kernel, ti=ti,
                                   wd_resident=wd_resident)
        wd_spec = (pl.BlockSpec(memory_space=pltpu.MemorySpace.VMEM)
                   if wd_resident else
                   pl.BlockSpec((ti, H), lambda i, j: (j, 0)))
        grid_spec = pltpu.PrefetchScalarGridSpec(
            num_scalar_prefetch=0,
            grid=(n_tok, n_red),
            in_specs=[
                pl.BlockSpec((tm, H), lambda i, j: (i, 0)),               # x tile
                pl.BlockSpec((H, ti), lambda i, j: (0, j)),               # gate cols
                pl.BlockSpec((H, ti), lambda i, j, n=n_red: (0, j + n)),  # up cols
                wd_spec,                                                  # down
            ],
            out_specs=pl.BlockSpec((tm, H), lambda i, j: (i, 0)),
            scratch_shapes=[pltpu.VMEM((tm, H), jnp.float32)],
        )
        dim_sem = ("parallel", "arbitrary")
        # Merged gate_up weight is passed twice (shifted index_maps) to avoid
        # materializing column-slice copies in HBM.
        args = (x, w_gate_up, w_gate_up, w_down)

    out = pl.pallas_call(
        kernel,
        out_shape=jax.ShapeDtypeStruct((S_pad, H), x.dtype),
        grid_spec=grid_spec,
        compiler_params=pltpu.CompilerParams(
            dimension_semantics=dim_sem,
            vmem_limit_bytes=int(vmem_limit),
        ),
        cost_estimate=pl.CostEstimate(
            flops=6 * S_pad * H * I,
            transcendentals=S_pad * I,
            bytes_accessed=int(bytes_accessed)),
    )(*args)

    return out[:S] if S_pad != S else out


# ---------------------------------------------------------------------------
# Reference + self-test
# ---------------------------------------------------------------------------

def _reference_mlp(x, w_gate_up, w_down):
    I = w_down.shape[0]
    gate_up = x.astype(jnp.float32) @ w_gate_up.astype(jnp.float32)
    gate, up = gate_up[:, :I], gate_up[:, I:]
    h = jax.nn.silu(gate) * up
    return (h @ w_down.astype(jnp.float32)).astype(x.dtype)


if __name__ == "__main__":
    # Small, Pixtral-like (but tiny) config: hidden_size=128, intermediate=256.
    seq = 16
    hidden_size = 128
    intermediate_size = 256

    key = jax.random.PRNGKey(0)
    kx, kg, kd = jax.random.split(key, 3)

    x = jax.random.normal(kx, (seq, hidden_size), dtype=jnp.float32)
    w_gate_up = (
        jax.random.normal(kg, (hidden_size, 2 * intermediate_size), dtype=jnp.float32)
        * 0.02
    )
    w_down = (
        jax.random.normal(kd, (intermediate_size, hidden_size), dtype=jnp.float32)
        * 0.02
    )
    ref = _reference_mlp(x, w_gate_up, w_down)

    # 1) f32, resident-weight path (whole weights in VMEM, no accumulator).
    out = jax.block_until_ready(pixtral_mlp(x, w_gate_up, w_down))
    assert out.shape == (seq, hidden_size)
    assert jnp.allclose(out, ref, atol=1e-4, rtol=1e-4), "f32 resident mismatch"

    # 2) f32, ragged sequence (padding path) + forced streaming (ti < I) with a
    #    VMEM-resident W_down (exercises accumulator + dual gate_up specs).
    x13 = x[:13]
    out13 = jax.block_until_ready(pixtral_mlp(x13, w_gate_up, w_down, ti=128))
    ref13 = _reference_mlp(x13, w_gate_up, w_down)
    assert out13.shape == (13, hidden_size)
    assert jnp.allclose(out13, ref13, atol=1e-4, rtol=1e-4), "stream mismatch"

    # 3) f32, forced streaming with a streamed W_down slab.
    out_s = jax.block_until_ready(
        pixtral_mlp(x, w_gate_up, w_down, ti=128, wd_resident=False))
    assert jnp.allclose(out_s, ref, atol=1e-4, rtol=1e-4), "streamed-Wd mismatch"

    # 4) bf16 activations + weights (fast MXU mode), f32 in-kernel accumulate.
    xb = x.astype(jnp.bfloat16)
    wgb = w_gate_up.astype(jnp.bfloat16)
    wdb = w_down.astype(jnp.bfloat16)
    outb = jax.block_until_ready(pixtral_mlp(xb, wgb, wdb))
    refb = _reference_mlp(xb, wgb, wdb)
    assert outb.shape == (seq, hidden_size)
    assert jnp.allclose(outb.astype(jnp.float32), refb.astype(jnp.float32),
                        atol=1e-2, rtol=1e-1), "bf16 mismatch vs reference"

    print("KERNEL_OK")
</pallas_src>

<mosaic_0001>
module attributes {stable_mosaic.version = 11 : i64} {
  func.func @_mlp_resident_kernel(%arg0: i32, %arg1: memref<16x128xf32, #tpu.memory_space<vmem>>, %arg2: memref<128x512xf32, #tpu.memory_space<vmem>>, %arg3: memref<256x128xf32, #tpu.memory_space<vmem>>, %arg4: memref<16x128xf32, #tpu.memory_space<vmem>>) attributes {dimension_semantics = [#tpu.dimension_semantics<parallel>], iteration_bounds = array<i64: 1>, scalar_prefetch = 0 : i64, scratch_operands = 0 : i64, tpu.core_type = #tpu.core_type<tc>, window_params = [{transform_indices = @transform_0, window_bounds = array<i64: 16, 128>}, {pipeline_mode = #tpu.pipeline_mode<synchronous>, transform_indices = @transform_1, window_bounds = array<i64: 128, 512>}, {pipeline_mode = #tpu.pipeline_mode<synchronous>, transform_indices = @transform_2, window_bounds = array<i64: 256, 128>}, {transform_indices = @transform_3, window_bounds = array<i64: 16, 128>}]} {
    %c0 = arith.constant 0 : index
    %c0_0 = arith.constant 0 : index
    %0 = vector.load %arg1[%c0, %c0_0] : memref<16x128xf32, #tpu.memory_space<vmem>>, vector<16x128xf32>
    %c0_1 = arith.constant 0 : index
    %c0_2 = arith.constant 0 : index
    %1 = vector.load %arg2[%c0_1, %c0_2] : memref<128x512xf32, #tpu.memory_space<vmem>>, vector<128x256xf32>
    %cst = arith.constant dense<0.000000e+00> : vector<16x256xf32>
    %2 = tpu.matmul %0, %1, %cst {dimension_numbers = #tpu.dot_dimension_numbers<[1], [0], [0], [1], [0, 0, 1, 1], [], []>} : vector<16x128xf32>, vector<128x256xf32>, vector<16x256xf32> -> vector<16x256xf32>
    %c0_3 = arith.constant 0 : index
    %c256 = arith.constant 256 : index
    %3 = vector.load %arg2[%c0_3, %c256] : memref<128x512xf32, #tpu.memory_space<vmem>>, vector<128x256xf32>
    %cst_4 = arith.constant dense<0.000000e+00> : vector<16x256xf32>
    %4 = tpu.matmul %0, %3, %cst_4 {dimension_numbers = #tpu.dot_dimension_numbers<[1], [0], [0], [1], [0, 0, 1, 1], [], []>} : vector<16x128xf32>, vector<128x256xf32>, vector<16x256xf32> -> vector<16x256xf32>
    %5 = arith.negf %2 : vector<16x256xf32>
    %6 = math.exp %5 : vector<16x256xf32>
    %cst_5 = arith.constant 1.000000e+00 : f32
    %7 = vector.broadcast %cst_5 : f32 to vector<16x256xf32>
    %8 = arith.addf %7, %6 : vector<16x256xf32>
    %9 = arith.divf %7, %8 : vector<16x256xf32>
    %10 = arith.mulf %2, %9 : vector<16x256xf32>
    %11 = arith.mulf %10, %4 : vector<16x256xf32>
    %c0_6 = arith.constant 0 : index
    %c0_7 = arith.constant 0 : index
    %12 = vector.load %arg3[%c0_6, %c0_7] : memref<256x128xf32, #tpu.memory_space<vmem>>, vector<256x128xf32>
    %cst_8 = arith.constant dense<0.000000e+00> : vector<16x128xf32>
    %13 = tpu.matmul %11, %12, %cst_8 {dimension_numbers = #tpu.dot_dimension_numbers<[1], [0], [0], [1], [0, 0, 1, 1], [], []>} : vector<16x256xf32>, vector<256x128xf32>, vector<16x128xf32> -> vector<16x128xf32>
    %c0_9 = arith.constant 0 : index
    %c0_10 = arith.constant 0 : index
    %14 = vector.load %arg4[%c0_9, %c0_10] : memref<16x128xf32, #tpu.memory_space<vmem>>, vector<16x128xf32>
    tpu.vector_store %arg4[%c0_9, %c0_10], %13 {strides = array<i32>} : memref<16x128xf32, #tpu.memory_space<vmem>>, vector<16x128xf32>,
    return
  }
  func.func @transform_0(%arg0: i32) -> (i32, i32) {
    %c0_i32 = arith.constant 0 : i32
    %c0_i32_0 = arith.constant 0 : i32
    return %arg0, %c0_i32 : i32, i32
  }
  func.func @transform_1(%arg0: i32) -> (i32, i32) {
    %c0_i32 = arith.constant 0 : i32
    %c0_i32_0 = arith.constant 0 : i32
    %c0_i32_1 = arith.constant 0 : i32
    return %c0_i32, %c0_i32_0 : i32, i32
  }
  func.func @transform_2(%arg0: i32) -> (i32, i32) {
    %c0_i32 = arith.constant 0 : i32
    %c0_i32_0 = arith.constant 0 : i32
    %c0_i32_1 = arith.constant 0 : i32
    return %c0_i32, %c0_i32_0 : i32, i32
  }
  func.func @transform_3(%arg0: i32) -> (i32, i32) {
    %c0_i32 = arith.constant 0 : i32
    %c0_i32_0 = arith.constant 0 : i32
    return %arg0, %c0_i32 : i32, i32
  }
}

</mosaic_0001>

<llo_original>
// kernel: tpu_custom_call.1
$region0: #{tpu_custom_call.1}
  #allocation0 [shape = 'u32[]', space=smem, size = 0x4, offset = 0x4, fixed_abs, tag = 'smem constant byte address 0x4 - core index']
  #allocation1 [shape = 'u32[72,128]{1,0:T(1,128)}', space=vmem, size = 0x9000, scoped, tag = 'internal scratch']
  %s0 = inlined_call_operand.hbm [shape: f32[16,128], index: 0, kind: input, shape index: {}]
  %s1 = inlined_call_operand.hbm [shape: f32[128,512], index: 1, kind: input, shape index: {}]
  %s2 = inlined_call_operand.hbm [shape: f32[256,128], index: 2, kind: input, shape index: {}]
  %s3 = inlined_call_operand.hbm [shape: f32[16,128], index: 3, kind: output, shape index: {}]
  %s4 = sld [smem:[#allocation0]]
  $region34: #{tpu_custom_call.1} parent=0
    _
  %s6 = ssub.s32 1, %s4
  %s7 = scalar_select 0, %s6, %s4
  $region1: #{tpu_custom_call.1} parent=0
    #allocation2 [shape = 'u8[8192]{0}', space=vmem, size = 0x2000, scoped, tag = 'input window, operand 0, single buffered']
    #allocation3 [shape = 's32[1]{0}', space=sflag, size = 0x4, scoped, tag = 'scoped memory for tpu_custom_call.1']
    #allocation4 [shape = 's32[1]{0}', space=sflag, size = 0x4, scoped, tag = 'scoped memory for tpu_custom_call.1']
    #allocation5 [shape = 'u8[262144]{0}', space=vmem, size = 0x40000, scoped, tag = 'input window, operand 1, single buffered']
    #allocation6 [shape = 's32[1]{0}', space=sflag, size = 0x4, scoped, tag = 'scoped memory for tpu_custom_call.1']
    #allocation7 [shape = 'u8[131072]{0}', space=vmem, size = 0x20000, scoped, tag = 'input window, operand 2, single buffered']
    #allocation8 [shape = 'u8[8192]{0}', space=vmem, size = 0x2000, scoped, tag = 'output window, operand 0, single buffered']
    %8 = vsyncpa [#allocation3], 0
    %9 = vsyncpa [#allocation6], 0
    %10 = vsyncpa [#allocation4], 0
    // Predicated region
    $region2: #{tpu_custom_call.1} parent=1 // pred_check
      _
    $region3: #{tpu_custom_call.1} parent=1 // pred_check_branch
      %12 = sbr.rel (0) target = $region5
    $region4: #{tpu_custom_call.1} parent=1 // pred_region
      %14 = vsyncadd [#allocation3], 0
      %s15 = sshll.u32 %s0, 4
      %s16 = int_to_ptr.hbm [resolvable:$true] %s15
      %s17 = sshll.u32 [#allocation2], 4
      %s18 = int_to_ptr.vmem [resolvable:$true] %s17
      %23 = dma.hbm_to_vmem [thread:$0]  %s16, 256, %s18, [#allocation3], 128, 128, 8
    $region5: #{tpu_custom_call.1} parent=1 // pred_fallthru
      _
    // Predicated region
    $region6: #{tpu_custom_call.1} parent=1 // pred_check
      _
    $region7: #{tpu_custom_call.1} parent=1 // pred_check_branch
      %25 = sbr.rel (0) target = $region9
    $region8: #{tpu_custom_call.1} parent=1 // pred_region
      %27 = vsyncadd [#allocation6], 0
      %s28 = sshll.u32 %s1, 4
      %s29 = int_to_ptr.hbm [resolvable:$true] %s28
      %s30 = sshll.u32 [#allocation5], 4
      %s31 = int_to_ptr.vmem [resolvable:$true] %s30
      %36 = dma.hbm_to_vmem [thread:$0]  %s29, 8192, %s31, [#allocation6], 512, 512, 32
    $region9: #{tpu_custom_call.1} parent=1 // pred_fallthru
      _
    // Predicated region
    $region10: #{tpu_custom_call.1} parent=1 // pred_check
      _
    $region11: #{tpu_custom_call.1} parent=1 // pred_check_branch
      %38 = sbr.rel (0) target = $region13
    $region12: #{tpu_custom_call.1} parent=1 // pred_region
      %40 = vsyncadd [#allocation6], 0
      %s41 = sshll.u32 %s2, 4
      %s42 = int_to_ptr.hbm [resolvable:$true] %s41
      %s43 = sshll.u32 [#allocation7], 4
      %s44 = int_to_ptr.vmem [resolvable:$true] %s43
      %49 = dma.hbm_to_vmem [thread:$0]  %s42, 4096, %s44, [#allocation6], 128, 128, 8
    $region13: #{tpu_custom_call.1} parent=1 // pred_fallthru
      _
    // Predicated region
    $region14: #{tpu_custom_call.1} parent=1 // pred_check
      _
    $region15: #{tpu_custom_call.1} parent=1 // pred_check_branch
      %51 = sbr.rel (0) target = $region17
    $region16: #{tpu_custom_call.1} parent=1 // pred_region
      %53 = dma.done [#allocation3], 256
    $region17: #{tpu_custom_call.1} parent=1 // pred_fallthru
      _
    // Predicated region
    $region18: #{tpu_custom_call.1} parent=1 // pred_check
      _
    $region19: #{tpu_custom_call.1} parent=1 // pred_check_branch
      %55 = sbr.rel (0) target = $region21
    $region20: #{tpu_custom_call.1} parent=1 // pred_region
      %57 = dma.done [#allocation6], 8192
    $region21: #{tpu_custom_call.1} parent=1 // pred_fallthru
      _
    // Predicated region
    $region22: #{tpu_custom_call.1} parent=1 // pred_check
      _
    $region23: #{tpu_custom_call.1} parent=1 // pred_check_branch
      %59 = sbr.rel (0) target = $region25
    $region24: #{tpu_custom_call.1} parent=1 // pred_region
      %61 = dma.done [#allocation6], 4096
    $region25: #{tpu_custom_call.1} parent=1 // pred_fallthru
      _
    %v62 = vld [vmem:[#allocation2] sm:$0xff]
    %v63 = vld [vmem:[#allocation2 + $0x8] sm:$0xff]
    %v64 = vld [vmem:[#allocation5] sm:$0xff]
    %v65 = vld [vmem:[#allocation5 + $0x8] sm:$0xff]
    %v66 = vld [vmem:[#allocation5 + $0x20] sm:$0xff]
    %v67 = vld [vmem:[#allocation5 + $0x28] sm:$0xff]
    %v68 = vld [vmem:[#allocation5 + $0x40] sm:$0xff]
    %v69 = vld [vmem:[#allocation5 + $0x48] sm:$0xff]
    %v70 = vld [vmem:[#allocation5 + $0x60] sm:$0xff]
    %v71 = vld [vmem:[#allocation5 + $0x68] sm:$0xff]
    %v72 = vld [vmem:[#allocation5 + $0x80] sm:$0xff]
    %v73 = vld [vmem:[#allocation5 + $0x88] sm:$0xff]
    %v74 = vld [vmem:[#allocation5 + $0xa0] sm:$0xff]
    %v75 = vld [vmem:[#allocation5 + $0xa8] sm:$0xff]
    %v76 = vld [vmem:[#allocation5 + $0xc0] sm:$0xff]
    %v77 = vld [vmem:[#allocation5 + $0xc8] sm:$0xff]
    %v78 = vld [vmem:[#allocation5 + $0xe0] sm:$0xff]
    %v79 = vld [vmem:[#allocation5 + $0xe8] sm:$0xff]
    %v80 = vld [vmem:[#allocation5 + $0x100] sm:$0xff]
    %v81 = vld [vmem:[#allocation5 + $0x108] sm:$0xff]
    %v82 = vld [vmem:[#allocation5 + $0x120] sm:$0xff]
    %v83 = vld [vmem:[#allocation5 + $0x128] sm:$0xff]
    %v84 = vld [vmem:[#allocation5 + $0x140] sm:$0xff]
    %v85 = vld [vmem:[#allocation5 + $0x148] sm:$0xff]
    %v86 = vld [vmem:[#allocation5 + $0x160] sm:$0xff]
    %v87 = vld [vmem:[#allocation5 + $0x168] sm:$0xff]
    %v88 = vld [vmem:[#allocation5 + $0x180] sm:$0xff]
    %v89 = vld [vmem:[#allocation5 + $0x188] sm:$0xff]
    %v90 = vld [vmem:[#allocation5 + $0x1a0] sm:$0xff]
    %v91 = vld [vmem:[#allocation5 + $0x1a8] sm:$0xff]
    %v92 = vld [vmem:[#allocation5 + $0x1c0] sm:$0xff]
    %v93 = vld [vmem:[#allocation5 + $0x1c8] sm:$0xff]
    %v94 = vld [vmem:[#allocation5 + $0x1e0] sm:$0xff]
    %v95 = vld [vmem:[#allocation5 + $0x1e8] sm:$0xff]
    %96 = vmatpush.msra.mxu0 %v94
    %97 = vmatpush.msra.mxu0 %v92
    %98 = vmatpush.msra.mxu0 %v90
    %99 = vmatpush.msra.mxu0 %v88
    %100 = vmatpush.msra.mxu0 %v86
    %101 = vmatpush.msra.mxu0 %v84
    %102 = vmatpush.msra.mxu0 %v82
    %103 = vmatpush.msra.mxu0 %v80
    %104 = vmatpush.msra.mxu0 %v78
    %105 = vmatpush.msra.mxu0 %v76
    %106 = vmatpush.msra.mxu0 %v74
    %107 = vmatpush.msra.mxu0 %v72
    %108 = vmatpush.msra.mxu0 %v70
    %109 = vmatpush.msra.mxu0 %v68
    %110 = vmatpush.msra.mxu0 %v66
    %111 = vmatpush.msra.mxu0 %v64
    %112 = vmatmul.f32.gmra.mxu0 %v62
    %v113 = vpop.f32.mrf.mxu0
    %v114 = vadd.f32 0.0, %v113
    %115 = vmatmul.f32.gmra.mxu0 %v63
    %v116 = vpop.f32.mrf.mxu0
    %v117 = vadd.f32 0.0, %v116
    %118 = vdwg.mxu0
    %119 = vmatpush.msra.mxu0 %v95
    %120 = vmatpush.msra.mxu0 %v93
    %121 = vmatpush.msra.mxu0 %v91
    %122 = vmatpush.msra.mxu0 %v89
    %123 = vmatpush.msra.mxu0 %v87
    %124 = vmatpush.msra.mxu0 %v85
    %125 = vmatpush.msra.mxu0 %v83
    %126 = vmatpush.msra.mxu0 %v81
    %127 = vmatpush.msra.mxu0 %v79
    %128 = vmatpush.msra.mxu0 %v77
    %129 = vmatpush.msra.mxu0 %v75
    %130 = vmatpush.msra.mxu0 %v73
    %131 = vmatpush.msra.mxu0 %v71
    %132 = vmatpush.msra.mxu0 %v69
    %133 = vmatpush.msra.mxu0 %v67
    %134 = vmatpush.msra.mxu0 %v65
    %135 = vmatmul.f32.gmra.mxu0 %v62
    %v136 = vpop.f32.mrf.mxu0
    %v137 = vadd.f32 0.0, %v136
    %138 = vmatmul.f32.gmra.mxu0 %v63
    %v139 = vpop.f32.mrf.mxu0
    %v140 = vadd.f32 0.0, %v139
    %141 = vdwg.mxu0
    %v142 = vld [vmem:[#allocation5 + $0x10] sm:$0xff]
    %v143 = vld [vmem:[#allocation5 + $0x18] sm:$0xff]
    %v144 = vld [vmem:[#allocation5 + $0x30] sm:$0xff]
    %v145 = vld [vmem:[#allocation5 + $0x38] sm:$0xff]
    %v146 = vld [vmem:[#allocation5 + $0x50] sm:$0xff]
    %v147 = vld [vmem:[#allocation5 + $0x58] sm:$0xff]
    %v148 = vld [vmem:[#allocation5 + $0x70] sm:$0xff]
    %v149 = vld [vmem:[#allocation5 + $0x78] sm:$0xff]
    %v150 = vld [vmem:[#allocation5 + $0x90] sm:$0xff]
    %v151 = vld [vmem:[#allocation5 + $0x98] sm:$0xff]
    %v152 = vld [vmem:[#allocation5 + $0xb0] sm:$0xff]
    %v153 = vld [vmem:[#allocation5 + $0xb8] sm:$0xff]
    %v154 = vld [vmem:[#allocation5 + $0xd0] sm:$0xff]
    %v155 = vld [vmem:[#allocation5 + $0xd8] sm:$0xff]
    %v156 = vld [vmem:[#allocation5 + $0xf0] sm:$0xff]
    %v157 = vld [vmem:[#allocation5 + $0xf8] sm:$0xff]
    %v158 = vld [vmem:[#allocation5 + $0x110] sm:$0xff]
    %v159 = vld [vmem:[#allocation5 + $0x118] sm:$0xff]
    %v160 = vld [vmem:[#allocation5 + $0x130] sm:$0xff]
    %v161 = vld [vmem:[#allocation5 + $0x138] sm:$0xff]
    %v162 = vld [vmem:[#allocation5 + $0x150] sm:$0xff]
    %v163 = vld [vmem:[#allocation5 + $0x158] sm:$0xff]
    %v164 = vld [vmem:[#allocation5 + $0x170] sm:$0xff]
    %v165 = vld [vmem:[#allocation5 + $0x178] sm:$0xff]
    %v166 = vld [vmem:[#allocation5 + $0x190] sm:$0xff]
    %v167 = vld [vmem:[#allocation5 + $0x198] sm:$0xff]
    %v168 = vld [vmem:[#allocation5 + $0x1b0] sm:$0xff]
    %v169 = vld [vmem:[#allocation5 + $0x1b8] sm:$0xff]
    %v170 = vld [vmem:[#allocation5 + $0x1d0] sm:$0xff]
    %v171 = vld [vmem:[#allocation5 + $0x1d8] sm:$0xff]
    %v172 = vld [vmem:[#allocation5 + $0x1f0] sm:$0xff]
    %v173 = vld [vmem:[#allocation5 + $0x1f8] sm:$0xff]
    %174 = vmatpush.msra.mxu0 %v172
    %175 = vmatpush.msra.mxu0 %v170
    %176 = vmatpush.msra.mxu0 %v168
    %177 = vmatpush.msra.mxu0 %v166
    %178 = vmatpush.msra.mxu0 %v164
    %179 = vmatpush.msra.mxu0 %v162
    %180 = vmatpush.msra.mxu0 %v160
    %181 = vmatpush.msra.mxu0 %v158
    %182 = vmatpush.msra.mxu0 %v156
    %183 = vmatpush.msra.mxu0 %v154
    %184 = vmatpush.msra.mxu0 %v152
    %185 = vmatpush.msra.mxu0 %v150
    %186 = vmatpush.msra.mxu0 %v148
    %187 = vmatpush.msra.mxu0 %v146
    %188 = vmatpush.msra.mxu0 %v144
    %189 = vmatpush.msra.mxu0 %v142
    %190 = vmatmul.f32.gmra.mxu0 %v62
    %v191 = vpop.f32.mrf.mxu0
    %v192 = vadd.f32 0.0, %v191
    %193 = vmatmul.f32.gmra.mxu0 %v63
    %v194 = vpop.f32.mrf.mxu0
    %v195 = vadd.f32 0.0, %v194
    %196 = vdwg.mxu0
    %197 = vmatpush.msra.mxu0 %v173
    %198 = vmatpush.msra.mxu0 %v171
    %199 = vmatpush.msra.mxu0 %v169
    %200 = vmatpush.msra.mxu0 %v167
    %201 = vmatpush.msra.mxu0 %v165
    %202 = vmatpush.msra.mxu0 %v163
    %203 = vmatpush.msra.mxu0 %v161
    %204 = vmatpush.msra.mxu0 %v159
    %205 = vmatpush.msra.mxu0 %v157
    %206 = vmatpush.msra.mxu0 %v155
    %207 = vmatpush.msra.mxu0 %v153
    %208 = vmatpush.msra.mxu0 %v151
    %209 = vmatpush.msra.mxu0 %v149
    %210 = vmatpush.msra.mxu0 %v147
    %211 = vmatpush.msra.mxu0 %v145
    %212 = vmatpush.msra.mxu0 %v143
    %213 = vmatmul.f32.gmra.mxu0 %v62
    %v214 = vpop.f32.mrf.mxu0
    %v215 = vadd.f32 0.0, %v214
    %216 = vmatmul.f32.gmra.mxu0 %v63
    %v217 = vpop.f32.mrf.mxu0
    %v218 = vadd.f32 0.0, %v217
    %219 = vdwg.mxu0
    %v220 = vxor.u32 %v114, 2147483648
    %v221 = vxor.u32 %v137, 2147483648
    %v222 = vxor.u32 %v117, 2147483648
    %v223 = vxor.u32 %v140, 2147483648
    %v224 = vmul.f32 %v220, 1.442695
    %v225 = vpow.pop %v224
    %v226 = vmul.f32 %v221, 1.442695
    %v227 = vpow.pop %v226
    %v228 = vmul.f32 %v222, 1.442695
    %v229 = vpow.pop %v228
    %v230 = vmul.f32 %v223, 1.442695
    %v231 = vpow.pop %v230
    %v232 = vadd.f32 %v225, 1.0
    %v233 = vadd.f32 %v227, 1.0
    %v234 = vadd.f32 %v229, 1.0
    %v235 = vadd.f32 %v231, 1.0
    %v236 = vrcp.pop %v232
    %v237 = vmul.f32 %v232, %v236
    %v238 = vsub.f32 1.0, %v237
    %v239 = vmul.f32 %v236, %v238
    %v240 = vadd.f32 %v236, %v239
    %vm241 = vweird.f32 %v232
    %vm242 = vweird.f32 %v236
    %vm243 = vmor %vm241, %vm242
    %v244 = vsel %vm243, %v236, %v240
    %v245 = vand.u32 2147483647, %v232
    %vm246 = vcmp.eq.f32.partialorder %v245, 8.507059e+37
    %v247 = vand.u32 %v232, 2147483648
    %v248 = vor.u32 1.1754944e-38, %v247
    %v249 = vsel %vm246, %v248, %v244
    %v250 = vmul.f32 1.0, %v249
    %v251 = vrcp.pop %v233
    %v252 = vmul.f32 %v233, %v251
    %v253 = vsub.f32 1.0, %v252
    %v254 = vmul.f32 %v251, %v253
    %v255 = vadd.f32 %v251, %v254
    %vm256 = vweird.f32 %v233
    %vm257 = vweird.f32 %v251
    %vm258 = vmor %vm256, %vm257
    %v259 = vsel %vm258, %v251, %v255
    %v260 = vand.u32 2147483647, %v233
    %vm261 = vcmp.eq.f32.partialorder %v260, 8.507059e+37
    %v262 = vand.u32 %v233, 2147483648
    %v263 = vor.u32 1.1754944e-38, %v262
    %v264 = vsel %vm261, %v263, %v259
    %v265 = vmul.f32 1.0, %v264
    %v266 = vrcp.pop %v234
    %v267 = vmul.f32 %v234, %v266
    %v268 = vsub.f32 1.0, %v267
    %v269 = vmul.f32 %v266, %v268
    %v270 = vadd.f32 %v266, %v269
    %vm271 = vweird.f32 %v234
    %vm272 = vweird.f32 %v266
    %vm273 = vmor %vm271, %vm272
    %v274 = vsel %vm273, %v266, %v270
    %v275 = vand.u32 2147483647, %v234
    %vm276 = vcmp.eq.f32.partialorder %v275, 8.507059e+37
    %v277 = vand.u32 %v234, 2147483648
    %v278 = vor.u32 1.1754944e-38, %v277
    %v279 = vsel %vm276, %v278, %v274
    %v280 = vmul.f32 1.0, %v279
    %v281 = vrcp.pop %v235
    %v282 = vmul.f32 %v235, %v281
    %v283 = vsub.f32 1.0, %v282
    %v284 = vmul.f32 %v281, %v283
    %v285 = vadd.f32 %v281, %v284
    %vm286 = vweird.f32 %v235
    %vm287 = vweird.f32 %v281
    %vm288 = vmor %vm286, %vm287
    %v289 = vsel %vm288, %v281, %v285
    %v290 = vand.u32 2147483647, %v235
    %vm291 = vcmp.eq.f32.partialorder %v290, 8.507059e+37
    %v292 = vand.u32 %v235, 2147483648
    %v293 = vor.u32 1.1754944e-38, %v292
    %v294 = vsel %vm291, %v293, %v289
    %v295 = vmul.f32 1.0, %v294
    %v296 = vmul.f32 %v114, %v250
    %v297 = vmul.f32 %v137, %v265
    %v298 = vmul.f32 %v117, %v280
    %v299 = vmul.f32 %v140, %v295
    %v300 = vmul.f32 %v296, %v192
    %v301 = vmul.f32 %v297, %v215
    %v302 = vmul.f32 %v298, %v195
    %v303 = vmul.f32 %v299, %v218
    %v304 = vld [vmem:[#allocation7] sm:$0xff]
    %v305 = vld [vmem:[#allocation7 + $0x8] sm:$0xff]
    %v306 = vld [vmem:[#allocation7 + $0x10] sm:$0xff]
    %v307 = vld [vmem:[#allocation7 + $0x18] sm:$0xff]
    %v308 = vld [vmem:[#allocation7 + $0x20] sm:$0xff]
    %v309 = vld [vmem:[#allocation7 + $0x28] sm:$0xff]
    %v310 = vld [vmem:[#allocation7 + $0x30] sm:$0xff]
    %v311 = vld [vmem:[#allocation7 + $0x38] sm:$0xff]
    %v312 = vld [vmem:[#allocation7 + $0x40] sm:$0xff]
    %v313 = vld [vmem:[#allocation7 + $0x48] sm:$0xff]
    %v314 = vld [vmem:[#allocation7 + $0x50] sm:$0xff]
    %v315 = vld [vmem:[#allocation7 + $0x58] sm:$0xff]
    %v316 = vld [vmem:[#allocation7 + $0x60] sm:$0xff]
    %v317 = vld [vmem:[#allocation7 + $0x68] sm:$0xff]
    %v318 = vld [vmem:[#allocation7 + $0x70] sm:$0xff]
    %v319 = vld [vmem:[#allocation7 + $0x78] sm:$0xff]
    %v320 = vld [vmem:[#allocation7 + $0x80] sm:$0xff]
    %v321 = vld [vmem:[#allocation7 + $0x88] sm:$0xff]
    %v322 = vld [vmem:[#allocation7 + $0x90] sm:$0xff]
    %v323 = vld [vmem:[#allocation7 + $0x98] sm:$0xff]
    %v324 = vld [vmem:[#allocation7 + $0xa0] sm:$0xff]
    %v325 = vld [vmem:[#allocation7 + $0xa8] sm:$0xff]
    %v326 = vld [vmem:[#allocation7 + $0xb0] sm:$0xff]
    %v327 = vld [vmem:[#allocation7 + $0xb8] sm:$0xff]
    %v328 = vld [vmem:[#allocation7 + $0xc0] sm:$0xff]
    %v329 = vld [vmem:[#allocation7 + $0xc8] sm:$0xff]
    %v330 = vld [vmem:[#allocation7 + $0xd0] sm:$0xff]
    %v331 = vld [vmem:[#allocation7 + $0xd8] sm:$0xff]
    %v332 = vld [vmem:[#allocation7 + $0xe0] sm:$0xff]
    %v333 = vld [vmem:[#allocation7 + $0xe8] sm:$0xff]
    %v334 = vld [vmem:[#allocation7 + $0xf0] sm:$0xff]
    %v335 = vld [vmem:[#allocation7 + $0xf8] sm:$0xff]
    %336 = vmatpush.msra.mxu0 %v319
    %337 = vmatpush.msra.mxu0 %v318
    %338 = vmatpush.msra.mxu0 %v317
    %339 = vmatpush.msra.mxu0 %v316
    %340 = vmatpush.msra.mxu0 %v315
    %341 = vmatpush.msra.mxu0 %v314
    %342 = vmatpush.msra.mxu0 %v313
    %343 = vmatpush.msra.mxu0 %v312
    %344 = vmatpush.msra.mxu0 %v311
    %345 = vmatpush.msra.mxu0 %v310
    %346 = vmatpush.msra.mxu0 %v309
    %347 = vmatpush.msra.mxu0 %v308
    %348 = vmatpush.msra.mxu0 %v307
    %349 = vmatpush.msra.mxu0 %v306
    %350 = vmatpush.msra.mxu0 %v305
    %351 = vmatpush.msra.mxu0 %v304
    %352 = vmatmul.f32.gmra.mxu0 %v300
    %v353 = vpop.f32.mrf.mxu0
    %v354 = vadd.f32 0.0, %v353
    %355 = vmatmul.f32.gmra.mxu0 %v302
    %v356 = vpop.f32.mrf.mxu0
    %v357 = vadd.f32 0.0, %v356
    %358 = vdwg.mxu0
    %359 = vmatpush.msra.mxu0 %v335
    %360 = vmatpush.msra.mxu0 %v334
    %361 = vmatpush.msra.mxu0 %v333
    %362 = vmatpush.msra.mxu0 %v332
    %363 = vmatpush.msra.mxu0 %v331
    %364 = vmatpush.msra.mxu0 %v330
    %365 = vmatpush.msra.mxu0 %v329
    %366 = vmatpush.msra.mxu0 %v328
    %367 = vmatpush.msra.mxu0 %v327
    %368 = vmatpush.msra.mxu0 %v326
    %369 = vmatpush.msra.mxu0 %v325
    %370 = vmatpush.msra.mxu0 %v324
    %371 = vmatpush.msra.mxu0 %v323
    %372 = vmatpush.msra.mxu0 %v322
    %373 = vmatpush.msra.mxu0 %v321
    %374 = vmatpush.msra.mxu0 %v320
    %375 = vmatmul.f32.gmra.mxu0 %v301
    %v376 = vpop.f32.mrf.mxu0
    %v377 = vadd.f32 %v354, %v376
    %378 = vmatmul.f32.gmra.mxu0 %v303
    %v379 = vpop.f32.mrf.mxu0
    %v380 = vadd.f32 %v357, %v379
    %381 = vdwg.mxu0
    %382 = vst [vmem:[#allocation8] sm:$0xff] %v377
    %383 = vst [vmem:[#allocation8 + $0x8] sm:$0xff] %v380
    // Predicated region
    $region26: #{tpu_custom_call.1} parent=1 // pred_check
      _
    $region27: #{tpu_custom_call.1} parent=1 // pred_check_branch
      %385 = sbr.rel (0) target = $region29
    $region28: #{tpu_custom_call.1} parent=1 // pred_region
      %387 = vsyncadd [#allocation4], 0
      %s388 = sshll.u32 [#allocation8], 4
      %s389 = int_to_ptr.vmem [resolvable:$true] %s388
      %s390 = sshll.u32 %s3, 4
      %s391 = int_to_ptr.hbm [resolvable:$true] %s390
      %396 = dma.vmem_to_hbm [thread:$0]  %s389, 256, %s391, [#allocation4], 128, 128, 8
    $region29: #{tpu_custom_call.1} parent=1 // pred_fallthru
      _
    // Predicated region
    $region30: #{tpu_custom_call.1} parent=1 // pred_check
      _
    $region31: #{tpu_custom_call.1} parent=1 // pred_check_branch
      %398 = sbr.rel (0) target = $region33
    $region32: #{tpu_custom_call.1} parent=1 // pred_region
      %400 = dma.done [#allocation4], 256
    $region33: #{tpu_custom_call.1} parent=1 // pred_fallthru
      _
    %401 = vsyncpa [#allocation3], 1
    %402 = vsyncpa [#allocation6], 1
    %403 = vsyncpa [#allocation4], 1

</llo_original>
